<compile_context>
chip_gen: v7x
topology: tpu7x:2x2x1
jax: 0.10.0
libtpu: 0.0.40
codegen_flags: <defaults>
</compile_context>

<pallas_src>
import math

import jax
import jax.numpy as jnp
from jax import lax
from jax.experimental import pallas as pl
from jax.experimental.pallas import tpu as pltpu


def _round_up(x: int, m: int) -> int:
    return ((x + m - 1) // m) * m


def _embedding_dims(cat_column_n_unique_values, embedding_max_dim, embedding_min_dim):
    dims = []
    for n_unique in cat_column_n_unique_values:
        d = min((n_unique + 2) // 3, embedding_max_dim)
        d = max(d, embedding_min_dim)
        dims.append(d)
    return tuple(dims)


def init_embedding_tables(key, cat_column_n_unique_values, embedding_max_dim, embedding_min_dim):
    """Deterministic init mimicking nn.init.kaiming_uniform_(w, a=sqrt(5)).

    For a 2-D weight (V, D): fan_in = D, gain = sqrt(2/(1+5)) = sqrt(1/3),
    bound = gain * sqrt(3/fan_in) = 1/sqrt(D)  ->  U(-1/sqrt(D), 1/sqrt(D)).
    """
    dims = _embedding_dims(cat_column_n_unique_values, embedding_max_dim, embedding_min_dim)
    tables = []
    for n_unique, d in zip(cat_column_n_unique_values, dims):
        key, sub = jax.random.split(key)
        bound = 1.0 / math.sqrt(d)
        w = jax.random.uniform(sub, (n_unique, d), jnp.float32, minval=-bound, maxval=bound)
        tables.append(w)
    return tables, dims


def _embed_kernel(x_ref, w_ref, out_ref):
    # x_ref:   (B_tile, C)        int32   -- all categorical columns of this batch tile
    # w_ref:   (C*V_pad, D_pad)   float32 -- block-diagonal packed embedding tables
    # out_ref: (B_tile, D_pad)    float32 -- lane-dense fused embedding output
    b_tile = x_ref.shape[0]
    n_cols = x_ref.shape[1]
    cv = w_ref.shape[0]
    v_pad = cv // n_cols

    # Global one-hot position of column c for every row: idx[b, c] + c * V_pad.
    iota = lax.broadcasted_iota(jnp.int32, (b_tile, cv), 1)          # (B_tile, C*V_pad)
    mask = iota == x_ref[:, 0:1]                                     # column 0 (offset 0)
    for c in range(1, n_cols):                                       # static, unrolled (C is small)
        mask = jnp.logical_or(mask, iota == (x_ref[:, c:c + 1] + c * v_pad))

    onehot = mask.astype(jnp.float32)                                # exact 0/1
    # Single MXU matmul: (B_tile, C*V_pad) x (C*V_pad, D_pad) -> (B_tile, D_pad).
    out_ref[...] = jnp.dot(onehot, w_ref[...], preferred_element_type=jnp.float32)


def categorical_embeddings_forward(x_categorical, tables, dims, *, b_tile_max=256):
    """x_categorical: [B, C] int array.  Returns [B, sum(dims)] float32."""
    x_categorical = x_categorical.astype(jnp.int32)
    b, c = x_categorical.shape
    assert c == len(tables), "number of embeddings must equal number of categorical columns"

    d_total = sum(dims)
    d_pad = _round_up(d_total, 128)                  # lane-dense output (unmasked vst)
    max_vocab = max(t.shape[0] for t in tables)
    v_pad = _round_up(max_vocab, 8)                  # sublane-aligned rows per column block

    # Block-diagonal weight: column c's table occupies rows [c*V_pad, c*V_pad+V_c)
    # and output columns [off_c, off_c + d_c).
    blocks = []
    off = 0
    for t, d in zip(tables, dims):
        v = t.shape[0]
        blocks.append(
            jnp.pad(t.astype(jnp.float32), ((0, v_pad - v), (off, d_pad - off - d)))
        )
        off += d
    w = jnp.concatenate(blocks, axis=0)              # (C*V_pad, D_pad)

    # Batch tiling: keeps the (B_tile, C*V_pad) f32 one-hot intermediate small
    # (fits comfortably under v7x's 32 MiB scoped VMEM default), and gives the
    # "parallel" axis real work for megacore sharding on 2-TC chips.
    b_tile = min(_round_up(b, 8), b_tile_max)
    b_pad = _round_up(b, b_tile)
    if b_pad != b:
        x_categorical = jnp.pad(x_categorical, ((0, b_pad - b), (0, 0)))

    out_padded = pl.pallas_call(
        _embed_kernel,
        out_shape=jax.ShapeDtypeStruct((b_pad, d_pad), jnp.float32),
        grid=(b_pad // b_tile,),
        in_specs=[
            pl.BlockSpec((b_tile, c), lambda i: (i, 0)),          # indices, full C per tile
            pl.BlockSpec((c * v_pad, d_pad), lambda i: (0, 0)),   # weight resident across grid
        ],
        out_specs=pl.BlockSpec((b_tile, d_pad), lambda i: (i, 0)),
        compiler_params=pltpu.CompilerParams(dimension_semantics=("parallel",)),
    )(x_categorical, w)

    # Single slice: strip batch padding and the lane padding of the fused feature axis.
    return out_padded[:b, :d_total]


def _reference(x_categorical, tables):
    x_categorical = x_categorical.astype(jnp.int32)
    embedded = [jnp.take(t, x_categorical[:, i], axis=0) for i, t in enumerate(tables)]
    return jnp.concatenate(embedded, axis=1)


if __name__ == "__main__":
    cat_column_n_unique_values = (7, 12, 30)
    embedding_max_dim = 8
    embedding_min_dim = 3
    batch = 8

    key = jax.random.PRNGKey(0)
    key_w, key_x = jax.random.split(key)

    tables, dims = init_embedding_tables(
        key_w, cat_column_n_unique_values, embedding_max_dim, embedding_min_dim
    )

    # Random categorical indices, one column per feature.
    cols = []
    for n_unique in cat_column_n_unique_values:
        key_x, sub = jax.random.split(key_x)
        cols.append(jax.random.randint(sub, (batch,), 0, n_unique, dtype=jnp.int32))
    x_categorical = jnp.stack(cols, axis=1)  # [B, C]

    out = categorical_embeddings_forward(x_categorical, tables, dims)
    out = jax.block_until_ready(out)

    ref = _reference(x_categorical, tables)
    assert out.shape == (batch, sum(dims)), (out.shape, sum(dims))
    assert jnp.allclose(out, ref, atol=1e-6), "mismatch vs reference"

    print("KERNEL_OK")
</pallas_src>

<mosaic_0001>
module attributes {stable_mosaic.version = 11 : i64} {
  func.func @_embed_kernel(%arg0: i32, %arg1: memref<8x3xi32, #tpu.memory_space<vmem>>, %arg2: memref<96x128xf32, #tpu.memory_space<vmem>>, %arg3: memref<8x128xf32, #tpu.memory_space<vmem>>) attributes {dimension_semantics = [#tpu.dimension_semantics<parallel>], iteration_bounds = array<i64: 1>, scalar_prefetch = 0 : i64, scratch_operands = 0 : i64, tpu.core_type = #tpu.core_type<tc>, window_params = [{transform_indices = @transform_0, window_bounds = array<i64: 8, 3>}, {pipeline_mode = #tpu.pipeline_mode<synchronous>, transform_indices = @transform_1, window_bounds = array<i64: 96, 128>}, {transform_indices = @transform_2, window_bounds = array<i64: 8, 128>}]} {
    %0 = tpu.iota {dimensions = array<i32: 1>} : vector<8x96xi32>
    %c0 = arith.constant 0 : index
    %c0_0 = arith.constant 0 : index
    %1 = vector.load %arg1[%c0, %c0_0] : memref<8x3xi32, #tpu.memory_space<vmem>>, vector<8x1xi32>
    %2 = vector.broadcast %1 : vector<8x1xi32> to vector<8x96xi32>
    %3 = arith.cmpi eq, %0, %2 : vector<8x96xi32>
    %c0_1 = arith.constant 0 : index
    %c1 = arith.constant 1 : index
    %4 = vector.load %arg1[%c0_1, %c1] : memref<8x3xi32, #tpu.memory_space<vmem>>, vector<8x1xi32>
    %c32_i32 = arith.constant 32 : i32
    %5 = vector.broadcast %c32_i32 : i32 to vector<8x1xi32>
    %6 = arith.addi %4, %5 : vector<8x1xi32>
    %7 = vector.broadcast %6 : vector<8x1xi32> to vector<8x96xi32>
    %8 = arith.cmpi eq, %0, %7 : vector<8x96xi32>
    %9 = arith.ori %3, %8 : vector<8x96xi1>
    %c0_2 = arith.constant 0 : index
    %c2 = arith.constant 2 : index
    %10 = vector.load %arg1[%c0_2, %c2] : memref<8x3xi32, #tpu.memory_space<vmem>>, vector<8x1xi32>
    %c64_i32 = arith.constant 64 : i32
    %11 = vector.broadcast %c64_i32 : i32 to vector<8x1xi32>
    %12 = arith.addi %10, %11 : vector<8x1xi32>
    %13 = vector.broadcast %12 : vector<8x1xi32> to vector<8x96xi32>
    %14 = arith.cmpi eq, %0, %13 : vector<8x96xi32>
    %15 = arith.ori %9, %14 : vector<8x96xi1>
    %16 = arith.extui %15 : vector<8x96xi1> to vector<8x96xi32>
    %17 = arith.sitofp %16 : vector<8x96xi32> to vector<8x96xf32>
    %c0_3 = arith.constant 0 : index
    %c0_4 = arith.constant 0 : index
    %18 = vector.load %arg2[%c0_3, %c0_4] : memref<96x128xf32, #tpu.memory_space<vmem>>, vector<96x128xf32>
    %cst = arith.constant dense<0.000000e+00> : vector<8x128xf32>
    %19 = tpu.matmul %17, %18, %cst {dimension_numbers = #tpu.dot_dimension_numbers<[1], [0], [0], [1], [0, 0, 1, 1], [], []>} : vector<8x96xf32>, vector<96x128xf32>, vector<8x128xf32> -> vector<8x128xf32>
    %c0_5 = arith.constant 0 : index
    %c0_6 = arith.constant 0 : index
    %20 = vector.load %arg3[%c0_5, %c0_6] : memref<8x128xf32, #tpu.memory_space<vmem>>, vector<8x128xf32>
    tpu.vector_store %arg3[%c0_5, %c0_6], %19 {strides = array<i32>} : memref<8x128xf32, #tpu.memory_space<vmem>>, vector<8x128xf32>,
    return
  }
  func.func @transform_0(%arg0: i32) -> (i32, i32) {
    %c0_i32 = arith.constant 0 : i32
    %c0_i32_0 = arith.constant 0 : i32
    return %arg0, %c0_i32 : i32, i32
  }
  func.func @transform_1(%arg0: i32) -> (i32, i32) {
    %c0_i32 = arith.constant 0 : i32
    %c0_i32_0 = arith.constant 0 : i32
    %c0_i32_1 = arith.constant 0 : i32
    return %c0_i32, %c0_i32_0 : i32, i32
  }
  func.func @transform_2(%arg0: i32) -> (i32, i32) {
    %c0_i32 = arith.constant 0 : i32
    %c0_i32_0 = arith.constant 0 : i32
    return %arg0, %c0_i32 : i32, i32
  }
}

</mosaic_0001>

<llo_original>
// kernel: tpu_custom_call.1
$region0: #{tpu_custom_call.1}
  #allocation0 [shape = 'u32[]', space=smem, size = 0x4, offset = 0x4, fixed_abs, tag = 'smem constant byte address 0x4 - core index']
  #allocation1 [shape = 'u32[144,128]{1,0:T(1,128)}', space=vmem, size = 0x12000, scoped, tag = 'internal scratch']
  %s0 = inlined_call_operand.vmem [shape: s32[8,3], index: 0, kind: input, shape index: {}]
  %s1 = inlined_call_operand.hbm [shape: f32[96,128], index: 1, kind: input, shape index: {}]
  %s2 = inlined_call_operand.hbm [shape: f32[8,128], index: 2, kind: output, shape index: {}]
  %s3 = sld [smem:[#allocation0]]
  $region22: #{tpu_custom_call.1} parent=0
    _
  %s5 = ssub.s32 1, %s3
  %s6 = scalar_select 0, %s5, %s3
  $region1: #{tpu_custom_call.1} parent=0
    #allocation2 [shape = 'u8[49152]{0}', space=vmem, size = 0xc000, scoped, tag = 'input window, operand 1, single buffered']
    #allocation3 [shape = 's32[1]{0}', space=sflag, size = 0x4, scoped, tag = 'scoped memory for tpu_custom_call.1']
    #allocation4 [shape = 's32[1]{0}', space=sflag, size = 0x4, scoped, tag = 'scoped memory for tpu_custom_call.1']
    #allocation5 [shape = 'u8[4096]{0}', space=vmem, size = 0x1000, scoped, tag = 'output window, operand 0, single buffered']
    %7 = vsyncpa [#allocation3], 0
    %8 = vsyncpa [#allocation4], 0
    // Predicated region
    $region2: #{tpu_custom_call.1} parent=1 // pred_check
      _
    $region3: #{tpu_custom_call.1} parent=1 // pred_check_branch
      %10 = sbr.rel (0) target = $region5
    $region4: #{tpu_custom_call.1} parent=1 // pred_region
      _
    $region5: #{tpu_custom_call.1} parent=1 // pred_fallthru
      _
    // Predicated region
    $region6: #{tpu_custom_call.1} parent=1 // pred_check
      _
    $region7: #{tpu_custom_call.1} parent=1 // pred_check_branch
      %12 = sbr.rel (0) target = $region9
    $region8: #{tpu_custom_call.1} parent=1 // pred_region
      %s14 = ssub.s32 1536, 1536
      %15 = vsyncadd [#allocation3], %s14
      %s16 = sshll.u32 [#allocation2], 4
      %s17 = int_to_ptr.vmem [resolvable:$true] %s16
      %22 = dma.hbm_to_vmem [thread:$0]  %s1, 1536, %s17, [#allocation3], 128, 128, 8
    $region9: #{tpu_custom_call.1} parent=1 // pred_fallthru
      _
    // Predicated region
    $region10: #{tpu_custom_call.1} parent=1 // pred_check
      _
    $region11: #{tpu_custom_call.1} parent=1 // pred_check_branch
      %24 = sbr.rel (0) target = $region13
    $region12: #{tpu_custom_call.1} parent=1 // pred_region
      %25 = dma.done [#allocation3], 1536
    $region13: #{tpu_custom_call.1} parent=1 // pred_fallthru
      _
    %v26 = vlaneseq
    %v27 = vand.u32 %v26, 127
    %v28 = vld [vmem:[%s0] sm:$0xff]
    %29 = vset.pattern.permute.xlu0 0
    %30 = vperm.xlu0 %29, %v28
    %v31 = vpop.permute.xlu0 %30
    %vm32 = vcmp.eq.s32.totalorder %v27, %v31
    %v33 = vadd.s32 %v28, 32
    %34 = vset.pattern.permute.xlu0 1
    %35 = vperm.xlu0 %34, %v33
    %v36 = vpop.permute.xlu0 %35
    %vm37 = vcmp.eq.s32.totalorder %v27, %v36
    %vm38 = vmor %vm32, %vm37
    %v39 = vadd.s32 %v28, 64
    %40 = vset.pattern.permute.xlu0 2
    %41 = vperm.xlu0 %40, %v39
    %v42 = vpop.permute.xlu0 %41
    %vm43 = vcmp.eq.s32.totalorder %v27, %v42
    %vm44 = vmor %vm38, %vm43
    %v45 = vsel %vm44, 1, 0
    %v46 = vcvt.s32.f32 %v45
    %v47 = vld [vmem:[#allocation2] sm:$0xff]
    %v48 = vld [vmem:[#allocation2 + $0x8] sm:$0xff]
    %v49 = vld [vmem:[#allocation2 + $0x10] sm:$0xff]
    %v50 = vld [vmem:[#allocation2 + $0x18] sm:$0xff]
    %v51 = vld [vmem:[#allocation2 + $0x20] sm:$0xff]
    %v52 = vld [vmem:[#allocation2 + $0x28] sm:$0xff]
    %v53 = vld [vmem:[#allocation2 + $0x30] sm:$0xff]
    %v54 = vld [vmem:[#allocation2 + $0x38] sm:$0xff]
    %v55 = vld [vmem:[#allocation2 + $0x40] sm:$0xff]
    %v56 = vld [vmem:[#allocation2 + $0x48] sm:$0xff]
    %v57 = vld [vmem:[#allocation2 + $0x50] sm:$0xff]
    %v58 = vld [vmem:[#allocation2 + $0x58] sm:$0xff]
    %vm59 = vcmask 785408
    %v61 = vsel %vm59, %v46, 0
    %63 = vmatprep.subr.mxu0 0.0
    %64 = vmatpush1.msra.mxu0 %v47
    %65 = vmatprep.subr.mxu0 0.0
    %66 = vmatpush1.msra.mxu0 %v48
    %67 = vmatprep.subr.mxu0 0.0
    %68 = vmatpush1.msra.mxu0 %v49
    %69 = vmatprep.subr.mxu0 0.0
    %70 = vmatpush1.msra.mxu0 %v50
    %71 = vmatprep.subr.mxu0 0.0
    %72 = vmatpush1.msra.mxu0 %v51
    %73 = vmatprep.subr.mxu0 0.0
    %74 = vmatpush1.msra.mxu0 %v52
    %75 = vmatprep.subr.mxu0 0.0
    %76 = vmatpush1.msra.mxu0 %v53
    %77 = vmatprep.subr.mxu0 0.0
    %78 = vmatpush1.msra.mxu0 %v54
    %79 = vmatprep.subr.mxu0 0.0
    %80 = vmatpush1.msra.mxu0 %v55
    %81 = vmatprep.subr.mxu0 0.0
    %82 = vmatpush1.msra.mxu0 %v56
    %83 = vmatprep.subr.mxu0 0.0
    %84 = vmatpush1.msra.mxu0 %v57
    %85 = vmatprep.subr.mxu0 0.0
    %86 = vmatpush1.msra.mxu0 %v58
    %87 = vmatprep.subr.mxu0 0.0
    %88 = vmatpush1.msra.mxu0 0.0
    %89 = vmatprep.subr.mxu0 0.0
    %90 = vmatpush1.msra.mxu0 0.0
    %91 = vmatprep.subr.mxu0 0.0
    %92 = vmatpush1.msra.mxu0 0.0
    %93 = vmatprep.subr.mxu0 0.0
    %94 = vmatpush1.msra.mxu0 0.0
    %95 = vmatprep.subr.mxu0 0.0
    %96 = vmatpush1.msra.mxu0 0.0
    %97 = vmatprep.subr.mxu0 0.0
    %98 = vmatpush1.msra.mxu0 0.0
    %99 = vmatprep.subr.mxu0 0.0
    %100 = vmatpush1.msra.mxu0 0.0
    %101 = vmatprep.subr.mxu0 0.0
    %102 = vmatpush1.msra.mxu0 0.0
    %103 = vmatprep.subr.mxu0 0.0
    %104 = vmatpush1.msra.mxu0 0.0
    %105 = vmatprep.subr.mxu0 0.0
    %106 = vmatpush1.msra.mxu0 0.0
    %107 = vmatprep.subr.mxu0 0.0
    %108 = vmatpush1.msra.mxu0 0.0
    %109 = vmatprep.subr.mxu0 0.0
    %110 = vmatpush1.msra.mxu0 0.0
    %111 = vmatprep.subr.mxu0 0.0
    %112 = vmatpush1.msra.mxu0 0.0
    %113 = vmatprep.subr.mxu0 0.0
    %114 = vmatpush1.msra.mxu0 0.0
    %115 = vmatprep.subr.mxu0 0.0
    %116 = vmatpush1.msra.mxu0 0.0
    %117 = vmatprep.subr.mxu0 0.0
    %118 = vmatpush1.msra.mxu0 0.0
    %119 = vmatprep.subr.mxu0 0.0
    %120 = vmatpush1.msra.mxu0 0.0
    %121 = vmatprep.subr.mxu0 0.0
    %122 = vmatpush1.msra.mxu0 0.0
    %123 = vmatprep.subr.mxu0 0.0
    %124 = vmatpush1.msra.mxu0 0.0
    %125 = vmatprep.subr.mxu0 0.0
    %126 = vmatpush1.msra.mxu0 0.0
    %127 = vmatprep.mubr.f32.mxu0 0.0
    %128 = vmatmul.mubr.f32.gmra.mrb[0].mxu0 %v61
    %v129 = vpop.f32.mrb[0].mxu0
    %v130 = vadd.f32 0.0, %v129
    %v131 = vpop.f32.mrb[0].mxu0
    %132 = vdwg.mxu0
    %133 = vst [vmem:[#allocation5] sm:$0xff] %v130
    // Predicated region
    $region14: #{tpu_custom_call.1} parent=1 // pred_check
      _
    $region15: #{tpu_custom_call.1} parent=1 // pred_check_branch
      %135 = sbr.rel (0) target = $region17
    $region16: #{tpu_custom_call.1} parent=1 // pred_region
      %s137 = ssub.s32 128, 128
      %138 = vsyncadd [#allocation4], %s137
      %s140 = sshll.u32 [#allocation5], 4
      %s141 = int_to_ptr.vmem [resolvable:$true] %s140
      %143 = dma.vmem_to_hbm [thread:$0]  %s141, 128, %s2, [#allocation4]
    $region17: #{tpu_custom_call.1} parent=1 // pred_fallthru
      _
    // Predicated region
    $region18: #{tpu_custom_call.1} parent=1 // pred_check
      _
    $region19: #{tpu_custom_call.1} parent=1 // pred_check_branch
      %145 = sbr.rel (0) target = $region21
    $region20: #{tpu_custom_call.1} parent=1 // pred_region
      %146 = dma.done [#allocation4], 128
    $region21: #{tpu_custom_call.1} parent=1 // pred_fallthru
      _
    %147 = vsyncpa [#allocation3], 1
    %148 = vsyncpa [#allocation4], 1

</llo_original>
